<compile_context>
chip_gen: v7x
topology: tpu7x:2x2x1
jax: 0.10.0
libtpu: 0.0.40
codegen_flags: <defaults>
</compile_context>

<pallas_src>
import functools
import math

import jax
import jax.numpy as jnp
from jax.experimental import pallas as pl
from jax.experimental.pallas import tpu as pltpu

HIDDEN = 256


def _round_up(x: int, m: int) -> int:
    return ((x + m - 1) // m) * m


# ----------------------------------------------------------------------------
# Kernel
# ----------------------------------------------------------------------------
def critic_kernel(s_ref, a_ref,
                  w14s_ref, w14a_ref, b14_ref,
                  w2_ref, b2_ref, w5_ref, b5_ref,
                  w36_ref, b36_ref,
                  out_ref):
    wdt = w14s_ref.dtype
    s = s_ref[...].astype(wdt)
    a = a_ref[...].astype(wdt)

    # Fused layer 1 of both heads; the state/action split of the weight
    # absorbs torch.cat([state, action], dim=1).
    hg = (jnp.dot(s, w14s_ref[...], preferred_element_type=jnp.float32)
          + jnp.dot(a, w14a_ref[...], preferred_element_type=jnp.float32)
          + b14_ref[...])
    hg = jnp.maximum(hg, 0.0)
    # HIDDEN = 256 is a multiple of 128, so these slices are lane-tile aligned.
    h = hg[:, :HIDDEN]          # Q1 head hidden
    g = hg[:, HIDDEN:]          # Q2 head hidden

    # Layer 2, per head (K = N = 256: a natural MXU tile).
    h2 = jnp.dot(h.astype(wdt), w2_ref[...],
                 preferred_element_type=jnp.float32) + b2_ref[...]
    h2 = jnp.maximum(h2, 0.0)
    g2 = jnp.dot(g.astype(wdt), w5_ref[...],
                 preferred_element_type=jnp.float32) + b5_ref[...]
    g2 = jnp.maximum(g2, 0.0)

    # Fused output layer: block-diagonal (512, 2) weight -> one (TB, 2) slab
    # instead of two lane-sparse (TB, 1) outputs.
    hg2 = jnp.concatenate([h2, g2], axis=1).astype(wdt)
    q12 = jnp.dot(hg2, w36_ref[...],
                  preferred_element_type=jnp.float32) + b36_ref[...]
    out_ref[...] = q12.astype(out_ref.dtype)


# ----------------------------------------------------------------------------
# Wrapper
# ----------------------------------------------------------------------------
@functools.partial(jax.jit, static_argnames=("block_b",))
def critic_forward(state, action, prep, *, block_b=512):
    """Returns (q1, q2), each [B, 1]. `prep` comes from prepare_critic_params."""
    B, sd = state.shape
    _, ad = action.shape

    # Batch tile: multiple of 8 sublanes, capped at block_b.
    tb = _round_up(min(block_b, _round_up(B, 8)), 8)
    b_pad = _round_up(B, tb)
    if b_pad != B:
        state = jnp.pad(state, ((0, b_pad - B), (0, 0)))
        action = jnp.pad(action, ((0, b_pad - B), (0, 0)))
    grid = (b_pad // tb,)

    def batch_spec(feat):
        return pl.BlockSpec((tb, feat), lambda i: (i, 0))

    def resident_spec(arr):
        # Whole array, block index constant across the grid -> DMAed once,
        # stays VMEM-resident while batch tiles stream through.
        return pl.BlockSpec(arr.shape, lambda i: (0, 0))

    operands = (state, action,
                prep["w14s"], prep["w14a"], prep["b14"],
                prep["w2"], prep["b2"], prep["w5"], prep["b5"],
                prep["w36"], prep["b36"])
    in_specs = [batch_spec(sd), batch_spec(ad)] + [resident_spec(x) for x in operands[2:]]

    d = sd + ad
    flops = b_pad * (2 * d * (2 * HIDDEN)          # fused layer 1 (both heads)
                     + 2 * (2 * HIDDEN * HIDDEN)   # layer 2, two heads
                     + 2 * (2 * HIDDEN) * 2)       # fused output layer
    bytes_accessed = (sum(int(x.size) * x.dtype.itemsize for x in operands)
                      + b_pad * 2 * 4)
    cost = pl.CostEstimate(flops=flops, transcendentals=0,
                           bytes_accessed=bytes_accessed)

    out = pl.pallas_call(
        critic_kernel,
        out_shape=jax.ShapeDtypeStruct((b_pad, 2), jnp.float32),
        grid=grid,
        in_specs=in_specs,
        out_specs=pl.BlockSpec((tb, 2), lambda i: (i, 0)),
        compiler_params=pltpu.CompilerParams(
            dimension_semantics=("parallel",)),   # batch axis across TCs (v7x)
        cost_estimate=cost,
    )(*operands)

    q12 = out[:B]
    return q12[:, 0:1], q12[:, 1:2]


# ----------------------------------------------------------------------------
# Parameters
# ----------------------------------------------------------------------------
def init_critic_params(key, state_dim, action_dim, hidden=HIDDEN):
    """PyTorch nn.Linear-style init (uniform +-1/sqrt(fan_in)).
    Weights stored [in_features, out_features]; biases [1, out_features]."""
    dims = [
        (state_dim + action_dim, hidden),  # l1
        (hidden, hidden),                  # l2
        (hidden, 1),                       # l3
        (state_dim + action_dim, hidden),  # l4
        (hidden, hidden),                  # l5
        (hidden, 1),                       # l6
    ]
    params = {}
    for i, (fan_in, fan_out) in enumerate(dims, start=1):
        key, kw, kb = jax.random.split(key, 3)
        bound = 1.0 / math.sqrt(fan_in)
        params[f"w{i}"] = jax.random.uniform(
            kw, (fan_in, fan_out), minval=-bound, maxval=bound, dtype=jnp.float32)
        params[f"b{i}"] = jax.random.uniform(
            kb, (1, fan_out), minval=-bound, maxval=bound, dtype=jnp.float32)
    return params


def prepare_critic_params(params, state_dim, *, weight_dtype=jnp.float32):
    """Fuse/split raw per-layer params into the kernel's operand layout."""
    w14 = jnp.concatenate([params["w1"], params["w4"]], axis=1)   # (D, 512)
    w14s, w14a = w14[:state_dim], w14[state_dim:]                 # state/action split
    b14 = jnp.concatenate([params["b1"], params["b4"]], axis=1)   # (1, 512)
    zero = jnp.zeros_like(params["w3"])
    w36 = jnp.concatenate(
        [jnp.concatenate([params["w3"], zero], axis=1),           # (256, 2)
         jnp.concatenate([zero, params["w6"]], axis=1)], axis=0)  # (512, 2) block-diag
    b36 = jnp.concatenate([params["b3"], params["b6"]], axis=1)   # (1, 2)
    return {
        "w14s": w14s.astype(weight_dtype),
        "w14a": w14a.astype(weight_dtype),
        "b14": b14.astype(jnp.float32),
        "w2": params["w2"].astype(weight_dtype),
        "b2": params["b2"].astype(jnp.float32),
        "w5": params["w5"].astype(weight_dtype),
        "b5": params["b5"].astype(jnp.float32),
        "w36": w36.astype(weight_dtype),
        "b36": b36.astype(jnp.float32),
    }


# ----------------------------------------------------------------------------
# Pure-JAX references
# ----------------------------------------------------------------------------
def critic_reference(state, action, params):
    """Reference forward using the original (f32) per-layer parameters."""
    sa = jnp.concatenate([state, action], axis=1)
    h = jax.nn.relu(sa @ params["w1"] + params["b1"])
    h = jax.nn.relu(h @ params["w2"] + params["b2"])
    q1 = h @ params["w3"] + params["b3"]
    g = jax.nn.relu(sa @ params["w4"] + params["b4"])
    g = jax.nn.relu(g @ params["w5"] + params["b5"])
    q2 = g @ params["w6"] + params["b6"]
    return q1, q2


def critic_reference_prepared(state, action, prep):
    """Reference using the prepared (possibly bf16) params, same casting as kernel."""
    wdt = prep["w14s"].dtype
    hg = (jnp.dot(state.astype(wdt), prep["w14s"], preferred_element_type=jnp.float32)
          + jnp.dot(action.astype(wdt), prep["w14a"], preferred_element_type=jnp.float32)
          + prep["b14"])
    hg = jax.nn.relu(hg)
    h, g = hg[:, :HIDDEN], hg[:, HIDDEN:]
    h2 = jax.nn.relu(jnp.dot(h.astype(wdt), prep["w2"],
                             preferred_element_type=jnp.float32) + prep["b2"])
    g2 = jax.nn.relu(jnp.dot(g.astype(wdt), prep["w5"],
                             preferred_element_type=jnp.float32) + prep["b5"])
    hg2 = jnp.concatenate([h2, g2], axis=1).astype(wdt)
    q12 = jnp.dot(hg2, prep["w36"], preferred_element_type=jnp.float32) + prep["b36"]
    return q12[:, 0:1], q12[:, 1:2]


if __name__ == "__main__":
    state_dim, action_dim, batch = 12, 4, 2

    key = jax.random.PRNGKey(0)
    key, ks, ka, kp = jax.random.split(key, 4)
    state = jax.random.normal(ks, (batch, state_dim), dtype=jnp.float32)
    action = jax.random.normal(ka, (batch, action_dim), dtype=jnp.float32)
    params = init_critic_params(kp, state_dim, action_dim)

    # --- f32 path, tiny batch (padded to one 8-row tile) ---
    prep_f32 = prepare_critic_params(params, state_dim, weight_dtype=jnp.float32)
    q1, q2 = critic_forward(state, action, prep_f32)
    jax.block_until_ready((q1, q2))
    r1, r2 = critic_reference(state, action, params)
    assert q1.shape == (batch, 1) and q2.shape == (batch, 1)
    assert jnp.allclose(q1, r1, atol=1e-4, rtol=1e-4)
    assert jnp.allclose(q2, r2, atol=1e-4, rtol=1e-4)

    # --- batch-grid path: non-divisible batch, multiple grid steps ---
    kb_s, kb_a = jax.random.split(key, 2)
    state_b = jax.random.normal(kb_s, (40, state_dim), dtype=jnp.float32)
    action_b = jax.random.normal(kb_a, (40, action_dim), dtype=jnp.float32)
    q1b, q2b = critic_forward(state_b, action_b, prep_f32, block_b=16)
    jax.block_until_ready((q1b, q2b))
    r1b, r2b = critic_reference(state_b, action_b, params)
    assert jnp.allclose(q1b, r1b, atol=1e-4, rtol=1e-4)
    assert jnp.allclose(q2b, r2b, atol=1e-4, rtol=1e-4)

    # --- bf16-weight path (halves weight DMA), checked vs matching reference ---
    prep_bf16 = prepare_critic_params(params, state_dim, weight_dtype=jnp.bfloat16)
    q1h, q2h = critic_forward(state, action, prep_bf16)
    jax.block_until_ready((q1h, q2h))
    r1h, r2h = critic_reference_prepared(state, action, prep_bf16)
    assert jnp.allclose(q1h, r1h, atol=1e-2, rtol=1e-2)
    assert jnp.allclose(q2h, r2h, atol=1e-2, rtol=1e-2)

    print("KERNEL_OK")
</pallas_src>

<mosaic_0001>
module attributes {stable_mosaic.version = 11 : i64} {
  func.func @critic_kernel(%arg0: i32, %arg1: memref<8x12xf32, #tpu.memory_space<vmem>>, %arg2: memref<8x4xf32, #tpu.memory_space<vmem>>, %arg3: memref<12x512xf32, #tpu.memory_space<vmem>>, %arg4: memref<4x512xf32, #tpu.memory_space<vmem>>, %arg5: memref<1x512xf32, #tpu.memory_space<vmem>>, %arg6: memref<256x256xf32, #tpu.memory_space<vmem>>, %arg7: memref<1x256xf32, #tpu.memory_space<vmem>>, %arg8: memref<256x256xf32, #tpu.memory_space<vmem>>, %arg9: memref<1x256xf32, #tpu.memory_space<vmem>>, %arg10: memref<512x2xf32, #tpu.memory_space<vmem>>, %arg11: memref<1x2xf32, #tpu.memory_space<vmem>>, %arg12: memref<8x2xf32, #tpu.memory_space<vmem>>) attributes {dimension_semantics = [#tpu.dimension_semantics<parallel>], iteration_bounds = array<i64: 1>, scalar_prefetch = 0 : i64, scratch_operands = 0 : i64, tpu.core_type = #tpu.core_type<tc>, window_params = [{transform_indices = @transform_0, window_bounds = array<i64: 8, 12>}, {transform_indices = @transform_1, window_bounds = array<i64: 8, 4>}, {pipeline_mode = #tpu.pipeline_mode<synchronous>, transform_indices = @transform_2, window_bounds = array<i64: 12, 512>}, {pipeline_mode = #tpu.pipeline_mode<synchronous>, transform_indices = @transform_3, window_bounds = array<i64: 4, 512>}, {pipeline_mode = #tpu.pipeline_mode<synchronous>, transform_indices = @transform_4, window_bounds = array<i64: 1, 512>}, {pipeline_mode = #tpu.pipeline_mode<synchronous>, transform_indices = @transform_5, window_bounds = array<i64: 256, 256>}, {pipeline_mode = #tpu.pipeline_mode<synchronous>, transform_indices = @transform_6, window_bounds = array<i64: 1, 256>}, {pipeline_mode = #tpu.pipeline_mode<synchronous>, transform_indices = @transform_7, window_bounds = array<i64: 256, 256>}, {pipeline_mode = #tpu.pipeline_mode<synchronous>, transform_indices = @transform_8, window_bounds = array<i64: 1, 256>}, {pipeline_mode = #tpu.pipeline_mode<synchronous>, transform_indices = @transform_9, window_bounds = array<i64: 512, 2>}, {pipeline_mode = #tpu.pipeline_mode<synchronous>, transform_indices = @transform_10, window_bounds = array<i64: 1, 2>}, {transform_indices = @transform_11, window_bounds = array<i64: 8, 2>}]} {
    %c0 = arith.constant 0 : index
    %c0_0 = arith.constant 0 : index
    %0 = vector.load %arg1[%c0, %c0_0] : memref<8x12xf32, #tpu.memory_space<vmem>>, vector<8x12xf32>
    %c0_1 = arith.constant 0 : index
    %c0_2 = arith.constant 0 : index
    %1 = vector.load %arg2[%c0_1, %c0_2] : memref<8x4xf32, #tpu.memory_space<vmem>>, vector<8x4xf32>
    %c0_3 = arith.constant 0 : index
    %c0_4 = arith.constant 0 : index
    %2 = vector.load %arg3[%c0_3, %c0_4] : memref<12x512xf32, #tpu.memory_space<vmem>>, vector<12x512xf32>
    %cst = arith.constant dense<0.000000e+00> : vector<8x512xf32>
    %3 = tpu.matmul %0, %2, %cst {dimension_numbers = #tpu.dot_dimension_numbers<[1], [0], [0], [1], [0, 0, 1, 1], [], []>} : vector<8x12xf32>, vector<12x512xf32>, vector<8x512xf32> -> vector<8x512xf32>
    %c0_5 = arith.constant 0 : index
    %c0_6 = arith.constant 0 : index
    %4 = vector.load %arg4[%c0_5, %c0_6] : memref<4x512xf32, #tpu.memory_space<vmem>>, vector<4x512xf32>
    %cst_7 = arith.constant dense<0.000000e+00> : vector<8x512xf32>
    %5 = tpu.matmul %1, %4, %cst_7 {dimension_numbers = #tpu.dot_dimension_numbers<[1], [0], [0], [1], [0, 0, 1, 1], [], []>} : vector<8x4xf32>, vector<4x512xf32>, vector<8x512xf32> -> vector<8x512xf32>
    %6 = arith.addf %3, %5 : vector<8x512xf32>
    %c0_8 = arith.constant 0 : index
    %c0_9 = arith.constant 0 : index
    %7 = vector.load %arg5[%c0_8, %c0_9] : memref<1x512xf32, #tpu.memory_space<vmem>>, vector<1x512xf32>
    %8 = vector.broadcast %7 : vector<1x512xf32> to vector<8x512xf32>
    %9 = arith.addf %6, %8 : vector<8x512xf32>
    %cst_10 = arith.constant 0.000000e+00 : f32
    %10 = vector.broadcast %cst_10 : f32 to vector<8x512xf32>
    %11 = arith.maximumf %9, %10 : vector<8x512xf32>
    %12 = vector.extract_strided_slice %11 {offsets = [0, 0], sizes = [8, 256], strides = [1, 1]} : vector<8x512xf32> to vector<8x256xf32>
    %13 = vector.extract_strided_slice %11 {offsets = [0, 256], sizes = [8, 256], strides = [1, 1]} : vector<8x512xf32> to vector<8x256xf32>
    %c0_11 = arith.constant 0 : index
    %c0_12 = arith.constant 0 : index
    %14 = vector.load %arg6[%c0_11, %c0_12] : memref<256x256xf32, #tpu.memory_space<vmem>>, vector<256x256xf32>
    %cst_13 = arith.constant dense<0.000000e+00> : vector<8x256xf32>
    %15 = tpu.matmul %12, %14, %cst_13 {dimension_numbers = #tpu.dot_dimension_numbers<[1], [0], [0], [1], [0, 0, 1, 1], [], []>} : vector<8x256xf32>, vector<256x256xf32>, vector<8x256xf32> -> vector<8x256xf32>
    %c0_14 = arith.constant 0 : index
    %c0_15 = arith.constant 0 : index
    %16 = vector.load %arg7[%c0_14, %c0_15] : memref<1x256xf32, #tpu.memory_space<vmem>>, vector<1x256xf32>
    %17 = vector.broadcast %16 : vector<1x256xf32> to vector<8x256xf32>
    %18 = arith.addf %15, %17 : vector<8x256xf32>
    %cst_16 = arith.constant 0.000000e+00 : f32
    %19 = vector.broadcast %cst_16 : f32 to vector<8x256xf32>
    %20 = arith.maximumf %18, %19 : vector<8x256xf32>
    %c0_17 = arith.constant 0 : index
    %c0_18 = arith.constant 0 : index
    %21 = vector.load %arg8[%c0_17, %c0_18] : memref<256x256xf32, #tpu.memory_space<vmem>>, vector<256x256xf32>
    %cst_19 = arith.constant dense<0.000000e+00> : vector<8x256xf32>
    %22 = tpu.matmul %13, %21, %cst_19 {dimension_numbers = #tpu.dot_dimension_numbers<[1], [0], [0], [1], [0, 0, 1, 1], [], []>} : vector<8x256xf32>, vector<256x256xf32>, vector<8x256xf32> -> vector<8x256xf32>
    %c0_20 = arith.constant 0 : index
    %c0_21 = arith.constant 0 : index
    %23 = vector.load %arg9[%c0_20, %c0_21] : memref<1x256xf32, #tpu.memory_space<vmem>>, vector<1x256xf32>
    %24 = vector.broadcast %23 : vector<1x256xf32> to vector<8x256xf32>
    %25 = arith.addf %22, %24 : vector<8x256xf32>
    %cst_22 = arith.constant 0.000000e+00 : f32
    %26 = vector.broadcast %cst_22 : f32 to vector<8x256xf32>
    %27 = arith.maximumf %25, %26 : vector<8x256xf32>
    %28 = tpu.concatenate %20, %27 in 1 : vector<8x256xf32>, vector<8x256xf32> -> vector<8x512xf32>
    %c0_23 = arith.constant 0 : index
    %c0_24 = arith.constant 0 : index
    %29 = vector.load %arg10[%c0_23, %c0_24] : memref<512x2xf32, #tpu.memory_space<vmem>>, vector<512x2xf32>
    %cst_25 = arith.constant dense<0.000000e+00> : vector<8x2xf32>
    %30 = tpu.matmul %28, %29, %cst_25 {dimension_numbers = #tpu.dot_dimension_numbers<[1], [0], [0], [1], [0, 0, 1, 1], [], []>} : vector<8x512xf32>, vector<512x2xf32>, vector<8x2xf32> -> vector<8x2xf32>
    %c0_26 = arith.constant 0 : index
    %c0_27 = arith.constant 0 : index
    %31 = vector.load %arg11[%c0_26, %c0_27] : memref<1x2xf32, #tpu.memory_space<vmem>>, vector<1x2xf32>
    %32 = vector.broadcast %31 : vector<1x2xf32> to vector<8x2xf32>
    %33 = arith.addf %30, %32 : vector<8x2xf32>
    %c0_28 = arith.constant 0 : index
    %c0_29 = arith.constant 0 : index
    %34 = vector.load %arg12[%c0_28, %c0_29] : memref<8x2xf32, #tpu.memory_space<vmem>>, vector<8x2xf32>
    tpu.vector_store %arg12[%c0_28, %c0_29], %33 {strides = array<i32>} : memref<8x2xf32, #tpu.memory_space<vmem>>, vector<8x2xf32>,
    return
  }
  func.func @transform_0(%arg0: i32) -> (i32, i32) {
    %c0_i32 = arith.constant 0 : i32
    %c0_i32_0 = arith.constant 0 : i32
    return %arg0, %c0_i32 : i32, i32
  }
  func.func @transform_1(%arg0: i32) -> (i32, i32) {
    %c0_i32 = arith.constant 0 : i32
    %c0_i32_0 = arith.constant 0 : i32
    return %arg0, %c0_i32 : i32, i32
  }
  func.func @transform_2(%arg0: i32) -> (i32, i32) {
    %c0_i32 = arith.constant 0 : i32
    %c0_i32_0 = arith.constant 0 : i32
    %c0_i32_1 = arith.constant 0 : i32
    return %c0_i32, %c0_i32_0 : i32, i32
  }
  func.func @transform_3(%arg0: i32) -> (i32, i32) {
    %c0_i32 = arith.constant 0 : i32
    %c0_i32_0 = arith.constant 0 : i32
    %c0_i32_1 = arith.constant 0 : i32
    return %c0_i32, %c0_i32_0 : i32, i32
  }
  func.func @transform_4(%arg0: i32) -> (i32, i32) {
    %c0_i32 = arith.constant 0 : i32
    %c0_i32_0 = arith.constant 0 : i32
    %c0_i32_1 = arith.constant 0 : i32
    return %c0_i32, %c0_i32_0 : i32, i32
  }
  func.func @transform_5(%arg0: i32) -> (i32, i32) {
    %c0_i32 = arith.constant 0 : i32
    %c0_i32_0 = arith.constant 0 : i32
    %c0_i32_1 = arith.constant 0 : i32
    return %c0_i32, %c0_i32_0 : i32, i32
  }
  func.func @transform_6(%arg0: i32) -> (i32, i32) {
    %c0_i32 = arith.constant 0 : i32
    %c0_i32_0 = arith.constant 0 : i32
    %c0_i32_1 = arith.constant 0 : i32
    return %c0_i32, %c0_i32_0 : i32, i32
  }
  func.func @transform_7(%arg0: i32) -> (i32, i32) {
    %c0_i32 = arith.constant 0 : i32
    %c0_i32_0 = arith.constant 0 : i32
    %c0_i32_1 = arith.constant 0 : i32
    return %c0_i32, %c0_i32_0 : i32, i32
  }
  func.func @transform_8(%arg0: i32) -> (i32, i32) {
    %c0_i32 = arith.constant 0 : i32
    %c0_i32_0 = arith.constant 0 : i32
    %c0_i32_1 = arith.constant 0 : i32
    return %c0_i32, %c0_i32_0 : i32, i32
  }
  func.func @transform_9(%arg0: i32) -> (i32, i32) {
    %c0_i32 = arith.constant 0 : i32
    %c0_i32_0 = arith.constant 0 : i32
    %c0_i32_1 = arith.constant 0 : i32
    return %c0_i32, %c0_i32_0 : i32, i32
  }
  func.func @transform_10(%arg0: i32) -> (i32, i32) {
    %c0_i32 = arith.constant 0 : i32
    %c0_i32_0 = arith.constant 0 : i32
    %c0_i32_1 = arith.constant 0 : i32
    return %c0_i32, %c0_i32_0 : i32, i32
  }
  func.func @transform_11(%arg0: i32) -> (i32, i32) {
    %c0_i32 = arith.constant 0 : i32
    %c0_i32_0 = arith.constant 0 : i32
    return %arg0, %c0_i32 : i32, i32
  }
}

</mosaic_0001>

<llo_original>
// kernel: critic_forward.1
$region0: #{critic_forward.1}
  #allocation0 [shape = 'u32[]', space=smem, size = 0x4, offset = 0x4, fixed_abs, tag = 'smem constant byte address 0x4 - core index']
  #allocation1 [shape = 'u32[144,128]{1,0:T(1,128)}', space=vmem, size = 0x12000, scoped, tag = 'internal scratch']
  %s0 = inlined_call_operand.vmem [shape: f32[8,12], index: 0, kind: input, shape index: {}]
  %s1 = inlined_call_operand.vmem [shape: f32[8,4], index: 1, kind: input, shape index: {}]
  %s2 = inlined_call_operand.hbm [shape: f32[12,512], index: 2, kind: input, shape index: {}]
  %s3 = inlined_call_operand.vmem [shape: f32[4,512], index: 3, kind: input, shape index: {}]
  %s4 = inlined_call_operand.vmem [shape: f32[1,512], index: 4, kind: input, shape index: {}]
  %s5 = inlined_call_operand.vmem [shape: f32[256,256], index: 5, kind: input, shape index: {}]
  %s6 = inlined_call_operand.vmem [shape: f32[1,256], index: 6, kind: input, shape index: {}]
  %s7 = inlined_call_operand.hbm [shape: f32[256,256], index: 7, kind: input, shape index: {}]
  %s8 = inlined_call_operand.vmem [shape: f32[1,256], index: 8, kind: input, shape index: {}]
  %s9 = inlined_call_operand.vmem [shape: f32[512,2], index: 9, kind: input, shape index: {}]
  %s10 = inlined_call_operand.vmem [shape: f32[1,2], index: 10, kind: input, shape index: {}]
  %s11 = inlined_call_operand.vmem [shape: f32[8,2], index: 11, kind: output, shape index: {}]
  %s12 = sld [smem:[#allocation0]]
  $region62: #{critic_forward.1} parent=0
    _
  %s14 = ssub.s32 1, %s12
  %s15 = scalar_select 0, %s14, %s12
  $region1: #{critic_forward.1} parent=0
    #allocation2 [shape = 'u8[32768]{0}', space=vmem, size = 0x8000, scoped, tag = 'input window, operand 2, single buffered']
    #allocation3 [shape = 's32[1]{0}', space=sflag, size = 0x4, scoped, tag = 'scoped memory for critic_forward.1']
    #allocation4 [shape = 'u8[262144]{0}', space=vmem, size = 0x40000, scoped, tag = 'input window, operand 7, single buffered']
    #allocation5 [shape = 's32[1]{0}', space=sflag, size = 0x4, scoped, tag = 'scoped memory for critic_forward.1']
    %16 = vsyncpa [#allocation3], 0
    %17 = vsyncpa [#allocation5], 0
    // Predicated region
    $region2: #{critic_forward.1} parent=1 // pred_check
      _
    $region3: #{critic_forward.1} parent=1 // pred_check_branch
      %19 = sbr.rel (0) target = $region5
    $region4: #{critic_forward.1} parent=1 // pred_region
      _
    $region5: #{critic_forward.1} parent=1 // pred_fallthru
      _
    // Predicated region
    $region6: #{critic_forward.1} parent=1 // pred_check
      _
    $region7: #{critic_forward.1} parent=1 // pred_check_branch
      %21 = sbr.rel (0) target = $region9
    $region8: #{critic_forward.1} parent=1 // pred_region
      _
    $region9: #{critic_forward.1} parent=1 // pred_fallthru
      _
    // Predicated region
    $region10: #{critic_forward.1} parent=1 // pred_check
      _
    $region11: #{critic_forward.1} parent=1 // pred_check_branch
      %23 = sbr.rel (0) target = $region13
    $region12: #{critic_forward.1} parent=1 // pred_region
      %s25 = ssub.s32 1024, 1024
      %26 = vsyncadd [#allocation3], %s25
      %s27 = sshll.u32 [#allocation2], 4
      %s28 = int_to_ptr.vmem [resolvable:$true] %s27
      %33 = dma.hbm_to_vmem [thread:$0]  %s2, 1024, %s28, [#allocation3], 512, 512, 32
    $region13: #{critic_forward.1} parent=1 // pred_fallthru
      _
    // Predicated region
    $region14: #{critic_forward.1} parent=1 // pred_check
      _
    $region15: #{critic_forward.1} parent=1 // pred_check_branch
      %35 = sbr.rel (0) target = $region17
    $region16: #{critic_forward.1} parent=1 // pred_region
      _
    $region17: #{critic_forward.1} parent=1 // pred_fallthru
      _
    // Predicated region
    $region18: #{critic_forward.1} parent=1 // pred_check
      _
    $region19: #{critic_forward.1} parent=1 // pred_check_branch
      %37 = sbr.rel (0) target = $region21
    $region20: #{critic_forward.1} parent=1 // pred_region
      _
    $region21: #{critic_forward.1} parent=1 // pred_fallthru
      _
    // Predicated region
    $region22: #{critic_forward.1} parent=1 // pred_check
      _
    $region23: #{critic_forward.1} parent=1 // pred_check_branch
      %39 = sbr.rel (0) target = $region25
    $region24: #{critic_forward.1} parent=1 // pred_region
      _
    $region25: #{critic_forward.1} parent=1 // pred_fallthru
      _
    // Predicated region
    $region26: #{critic_forward.1} parent=1 // pred_check
      _
    $region27: #{critic_forward.1} parent=1 // pred_check_branch
      %41 = sbr.rel (0) target = $region29
    $region28: #{critic_forward.1} parent=1 // pred_region
      _
    $region29: #{critic_forward.1} parent=1 // pred_fallthru
      _
    // Predicated region
    $region30: #{critic_forward.1} parent=1 // pred_check
      _
    $region31: #{critic_forward.1} parent=1 // pred_check_branch
      %43 = sbr.rel (0) target = $region33
    $region32: #{critic_forward.1} parent=1 // pred_region
      %s45 = ssub.s32 8192, 8192
      %46 = vsyncadd [#allocation5], %s45
      %s47 = sshll.u32 [#allocation4], 4
      %s48 = int_to_ptr.vmem [resolvable:$true] %s47
      %53 = dma.hbm_to_vmem [thread:$0]  %s7, 8192, %s48, [#allocation5], 256, 256, 16
    $region33: #{critic_forward.1} parent=1 // pred_fallthru
      _
    // Predicated region
    $region34: #{critic_forward.1} parent=1 // pred_check
      _
    $region35: #{critic_forward.1} parent=1 // pred_check_branch
      %55 = sbr.rel (0) target = $region37
    $region36: #{critic_forward.1} parent=1 // pred_region
      _
    $region37: #{critic_forward.1} parent=1 // pred_fallthru
      _
    // Predicated region
    $region38: #{critic_forward.1} parent=1 // pred_check
      _
    $region39: #{critic_forward.1} parent=1 // pred_check_branch
      %57 = sbr.rel (0) target = $region41
    $region40: #{critic_forward.1} parent=1 // pred_region
      _
    $region41: #{critic_forward.1} parent=1 // pred_fallthru
      _
    // Predicated region
    $region42: #{critic_forward.1} parent=1 // pred_check
      _
    $region43: #{critic_forward.1} parent=1 // pred_check_branch
      %59 = sbr.rel (0) target = $region45
    $region44: #{critic_forward.1} parent=1 // pred_region
      _
    $region45: #{critic_forward.1} parent=1 // pred_fallthru
      _
    // Predicated region
    $region46: #{critic_forward.1} parent=1 // pred_check
      _
    $region47: #{critic_forward.1} parent=1 // pred_check_branch
      %61 = sbr.rel (0) target = $region49
    $region48: #{critic_forward.1} parent=1 // pred_region
      %62 = dma.done [#allocation3], 1024
    $region49: #{critic_forward.1} parent=1 // pred_fallthru
      _
    // Predicated region
    $region50: #{critic_forward.1} parent=1 // pred_check
      _
    $region51: #{critic_forward.1} parent=1 // pred_check_branch
      %64 = sbr.rel (0) target = $region53
    $region52: #{critic_forward.1} parent=1 // pred_region
      %65 = dma.done [#allocation5], 8192
    $region53: #{critic_forward.1} parent=1 // pred_fallthru
      _
    %v66 = vld [vmem:[%s0] sm:$0xff]
    %v67 = vld [vmem:[%s1] sm:$0xff]
    %v68 = vld [vmem:[#allocation2] sm:$0xff]
    %v69 = vld [vmem:[#allocation2 + $0x8] sm:$0xff]
    %v70 = vld [vmem:[#allocation2 + $0x10] sm:$0xff]
    %v71 = vld [vmem:[#allocation2 + $0x18] sm:$0xff]
    %v72 = vld [vmem:[#allocation2 + $0x20] sm:$0xf]
    %v73 = vld [vmem:[#allocation2 + $0x28] sm:$0xf]
    %v74 = vld [vmem:[#allocation2 + $0x30] sm:$0xf]
    %v75 = vld [vmem:[#allocation2 + $0x38] sm:$0xf]
    %v76 = vld [vmem:[%s3] sm:$0xff]
    %v77 = vld [vmem:[%s3 + $0x8] sm:$0xff]
    %v80 = vcombine.high %v76, %v76
    %v81 = vcombine.high %v77, %v77
    %vm82 = vcmask 31744
    %v84 = vsel %vm82, %v67, 0
    %vm86 = vcmask 1043456
    %v87 = vsel %vm86, %v76, 0
    %v89 = vsel %vm86, %v80, 0
    %v91 = vsel %vm86, %v77, 0
    %v93 = vsel %vm86, %v81, 0
    %95 = vmatprep.subr.mxu0 %v89
    %96 = vmatpush1.msra.mxu0 %v87
    %97 = vmatprep.subr.mxu0 0.0
    %98 = vmatpush1.msra.mxu0 0.0
    %99 = vmatprep.subr.mxu0 0.0
    %100 = vmatpush1.msra.mxu0 0.0
    %101 = vmatprep.subr.mxu0 0.0
    %102 = vmatpush1.msra.mxu0 0.0
    %103 = vmatprep.subr.mxu0 0.0
    %104 = vmatpush1.msra.mxu0 0.0
    %105 = vmatprep.subr.mxu0 0.0
    %106 = vmatpush1.msra.mxu0 0.0
    %107 = vmatprep.subr.mxu0 0.0
    %108 = vmatpush1.msra.mxu0 0.0
    %109 = vmatprep.subr.mxu0 0.0
    %110 = vmatpush1.msra.mxu0 0.0
    %111 = vmatprep.subr.mxu0 0.0
    %112 = vmatpush1.msra.mxu0 0.0
    %113 = vmatprep.subr.mxu0 0.0
    %114 = vmatpush1.msra.mxu0 0.0
    %115 = vmatprep.subr.mxu0 0.0
    %116 = vmatpush1.msra.mxu0 0.0
    %117 = vmatprep.subr.mxu0 0.0
    %118 = vmatpush1.msra.mxu0 0.0
    %119 = vmatprep.subr.mxu0 0.0
    %120 = vmatpush1.msra.mxu0 0.0
    %121 = vmatprep.subr.mxu0 0.0
    %122 = vmatpush1.msra.mxu0 0.0
    %123 = vmatprep.subr.mxu0 0.0
    %124 = vmatpush1.msra.mxu0 0.0
    %125 = vmatprep.subr.mxu0 0.0
    %126 = vmatpush1.msra.mxu0 0.0
    %127 = vmatprep.subr.mxu0 0.0
    %128 = vmatpush1.msra.mxu0 0.0
    %129 = vmatprep.subr.mxu0 0.0
    %130 = vmatpush1.msra.mxu0 0.0
    %131 = vmatprep.subr.mxu0 0.0
    %132 = vmatpush1.msra.mxu0 0.0
    %133 = vmatprep.subr.mxu0 0.0
    %134 = vmatpush1.msra.mxu0 0.0
    %135 = vmatprep.subr.mxu0 0.0
    %136 = vmatpush1.msra.mxu0 0.0
    %137 = vmatprep.subr.mxu0 0.0
    %138 = vmatpush1.msra.mxu0 0.0
    %139 = vmatprep.subr.mxu0 0.0
    %140 = vmatpush1.msra.mxu0 0.0
    %141 = vmatprep.subr.mxu0 0.0
    %142 = vmatpush1.msra.mxu0 0.0
    %143 = vmatprep.subr.mxu0 0.0
    %144 = vmatpush1.msra.mxu0 0.0
    %145 = vmatprep.subr.mxu0 0.0
    %146 = vmatpush1.msra.mxu0 0.0
    %147 = vmatprep.subr.mxu0 0.0
    %148 = vmatpush1.msra.mxu0 0.0
    %149 = vmatprep.subr.mxu0 0.0
    %150 = vmatpush1.msra.mxu0 0.0
    %151 = vmatprep.subr.mxu0 0.0
    %152 = vmatpush1.msra.mxu0 0.0
    %153 = vmatprep.subr.mxu0 0.0
    %154 = vmatpush1.msra.mxu0 0.0
    %155 = vmatprep.subr.mxu0 0.0
    %156 = vmatpush1.msra.mxu0 0.0
    %157 = vmatprep.subr.mxu0 0.0
    %158 = vmatpush1.msra.mxu0 0.0
    %159 = vmatprep.mubr.f32.mxu0 0.0
    %160 = vmatmul.mubr.f32.gmra.mrb[0].mxu0 %v84
    %v161 = vpop.f32.mrb[0].mxu0
    %v162 = vadd.f32 0.0, %v161
    %v163 = vpop.f32.mrb[0].mxu0
    %v164 = vadd.f32 0.0, %v163
    %165 = vdwg.mxu0
    %166 = vmatprep.subr.mxu0 %v93
    %167 = vmatpush1.msra.mxu0 %v91
    %168 = vmatprep.subr.mxu0 0.0
    %169 = vmatpush1.msra.mxu0 0.0
    %170 = vmatprep.subr.mxu0 0.0
    %171 = vmatpush1.msra.mxu0 0.0
    %172 = vmatprep.subr.mxu0 0.0
    %173 = vmatpush1.msra.mxu0 0.0
    %174 = vmatprep.subr.mxu0 0.0
    %175 = vmatpush1.msra.mxu0 0.0
    %176 = vmatprep.subr.mxu0 0.0
    %177 = vmatpush1.msra.mxu0 0.0
    %178 = vmatprep.subr.mxu0 0.0
    %179 = vmatpush1.msra.mxu0 0.0
    %180 = vmatprep.subr.mxu0 0.0
    %181 = vmatpush1.msra.mxu0 0.0
    %182 = vmatprep.subr.mxu0 0.0
    %183 = vmatpush1.msra.mxu0 0.0
    %184 = vmatprep.subr.mxu0 0.0
    %185 = vmatpush1.msra.mxu0 0.0
    %186 = vmatprep.subr.mxu0 0.0
    %187 = vmatpush1.msra.mxu0 0.0
    %188 = vmatprep.subr.mxu0 0.0
    %189 = vmatpush1.msra.mxu0 0.0
    %190 = vmatprep.subr.mxu0 0.0
    %191 = vmatpush1.msra.mxu0 0.0
    %192 = vmatprep.subr.mxu0 0.0
    %193 = vmatpush1.msra.mxu0 0.0
    %194 = vmatprep.subr.mxu0 0.0
    %195 = vmatpush1.msra.mxu0 0.0
    %196 = vmatprep.subr.mxu0 0.0
    %197 = vmatpush1.msra.mxu0 0.0
    %198 = vmatprep.subr.mxu0 0.0
    %199 = vmatpush1.msra.mxu0 0.0
    %200 = vmatprep.subr.mxu0 0.0
    %201 = vmatpush1.msra.mxu0 0.0
    %202 = vmatprep.subr.mxu0 0.0
    %203 = vmatpush1.msra.mxu0 0.0
    %204 = vmatprep.subr.mxu0 0.0
    %205 = vmatpush1.msra.mxu0 0.0
    %206 = vmatprep.subr.mxu0 0.0
    %207 = vmatpush1.msra.mxu0 0.0
    %208 = vmatprep.subr.mxu0 0.0
    %209 = vmatpush1.msra.mxu0 0.0
    %210 = vmatprep.subr.mxu0 0.0
    %211 = vmatpush1.msra.mxu0 0.0
    %212 = vmatprep.subr.mxu0 0.0
    %213 = vmatpush1.msra.mxu0 0.0
    %214 = vmatprep.subr.mxu0 0.0
    %215 = vmatpush1.msra.mxu0 0.0
    %216 = vmatprep.subr.mxu0 0.0
    %217 = vmatpush1.msra.mxu0 0.0
    %218 = vmatprep.subr.mxu0 0.0
    %219 = vmatpush1.msra.mxu0 0.0
    %220 = vmatprep.subr.mxu0 0.0
    %221 = vmatpush1.msra.mxu0 0.0
    %222 = vmatprep.subr.mxu0 0.0
    %223 = vmatpush1.msra.mxu0 0.0
    %224 = vmatprep.subr.mxu0 0.0
    %225 = vmatpush1.msra.mxu0 0.0
    %226 = vmatprep.subr.mxu0 0.0
    %227 = vmatpush1.msra.mxu0 0.0
    %228 = vmatprep.subr.mxu0 0.0
    %229 = vmatpush1.msra.mxu0 0.0
    %230 = vmatprep.mubr.f32.mxu0 0.0
    %231 = vmatmul.mubr.f32.gmra.mrb[0].mxu0 %v84
    %v232 = vpop.f32.mrb[0].mxu0
    %v233 = vadd.f32 0.0, %v232
    %v234 = vpop.f32.mrb[0].mxu0
    %v235 = vadd.f32 0.0, %v234
    %236 = vdwg.mxu0
    %vm237 = vcmask 97280
    %v239 = vsel %vm237, %v66, 0
    %v242 = vsel %vm86, %v72, 0
    %v245 = vsel %vm86, %v73, 0
    %v248 = vsel %vm86, %v74, 0
    %v251 = vsel %vm86, %v75, 0
    %253 = vmatprep.subr.mxu0 %v69
    %254 = vmatpush1.msra.mxu0 %v68
    %255 = vmatprep.subr.mxu0 %v245
    %256 = vmatpush1.msra.mxu0 %v242
    %257 = vmatprep.subr.mxu0 0.0
    %258 = vmatpush1.msra.mxu0 0.0
    %259 = vmatprep.subr.mxu0 0.0
    %260 = vmatpush1.msra.mxu0 0.0
    %261 = vmatprep.subr.mxu0 0.0
    %262 = vmatpush1.msra.mxu0 0.0
    %263 = vmatprep.subr.mxu0 0.0
    %264 = vmatpush1.msra.mxu0 0.0
    %265 = vmatprep.subr.mxu0 0.0
    %266 = vmatpush1.msra.mxu0 0.0
    %267 = vmatprep.subr.mxu0 0.0
    %268 = vmatpush1.msra.mxu0 0.0
    %269 = vmatprep.subr.mxu0 0.0
    %270 = vmatpush1.msra.mxu0 0.0
    %271 = vmatprep.subr.mxu0 0.0
    %272 = vmatpush1.msra.mxu0 0.0
    %273 = vmatprep.subr.mxu0 0.0
    %274 = vmatpush1.msra.mxu0 0.0
    %275 = vmatprep.subr.mxu0 0.0
    %276 = vmatpush1.msra.mxu0 0.0
    %277 = vmatprep.subr.mxu0 0.0
    %278 = vmatpush1.msra.mxu0 0.0
    %279 = vmatprep.subr.mxu0 0.0
    %280 = vmatpush1.msra.mxu0 0.0
    %281 = vmatprep.subr.mxu0 0.0
    %282 = vmatpush1.msra.mxu0 0.0
    %283 = vmatprep.subr.mxu0 0.0
    %284 = vmatpush1.msra.mxu0 0.0
    %285 = vmatprep.subr.mxu0 0.0
    %286 = vmatpush1.msra.mxu0 0.0
    %287 = vmatprep.subr.mxu0 0.0
    %288 = vmatpush1.msra.mxu0 0.0
    %289 = vmatprep.subr.mxu0 0.0
    %290 = vmatpush1.msra.mxu0 0.0
    %291 = vmatprep.subr.mxu0 0.0
    %292 = vmatpush1.msra.mxu0 0.0
    %293 = vmatprep.subr.mxu0 0.0
    %294 = vmatpush1.msra.mxu0 0.0
    %295 = vmatprep.subr.mxu0 0.0
    %296 = vmatpush1.msra.mxu0 0.0
    %297 = vmatprep.subr.mxu0 0.0
    %298 = vmatpush1.msra.mxu0 0.0
    %299 = vmatprep.subr.mxu0 0.0
    %300 = vmatpush1.msra.mxu0 0.0
    %301 = vmatprep.subr.mxu0 0.0
    %302 = vmatpush1.msra.mxu0 0.0
    %303 = vmatprep.subr.mxu0 0.0
    %304 = vmatpush1.msra.mxu0 0.0
    %305 = vmatprep.subr.mxu0 0.0
    %306 = vmatpush1.msra.mxu0 0.0
    %307 = vmatprep.subr.mxu0 0.0
    %308 = vmatpush1.msra.mxu0 0.0
    %309 = vmatprep.subr.mxu0 0.0
    %310 = vmatpush1.msra.mxu0 0.0
    %311 = vmatprep.subr.mxu0 0.0
    %312 = vmatpush1.msra.mxu0 0.0
    %313 = vmatprep.subr.mxu0 0.0
    %314 = vmatpush1.msra.mxu0 0.0
    %315 = vmatprep.subr.mxu0 0.0
    %316 = vmatpush1.msra.mxu0 0.0
    %317 = vmatprep.mubr.f32.mxu0 0.0
    %318 = vmatmul.mubr.f32.gmra.mrb[0].mxu0 %v239
    %v319 = vpop.f32.mrb[0].mxu0
    %v320 = vadd.f32 %v162, %v319
    %v321 = vpop.f32.mrb[0].mxu0
    %v322 = vadd.f32 %v164, %v321
    %323 = vdwg.mxu0
    %324 = vmatprep.subr.mxu0 %v71
    %325 = vmatpush1.msra.mxu0 %v70
    %326 = vmatprep.subr.mxu0 %v251
    %327 = vmatpush1.msra.mxu0 %v248
    %328 = vmatprep.subr.mxu0 0.0
    %329 = vmatpush1.msra.mxu0 0.0
    %330 = vmatprep.subr.mxu0 0.0
    %331 = vmatpush1.msra.mxu0 0.0
    %332 = vmatprep.subr.mxu0 0.0
    %333 = vmatpush1.msra.mxu0 0.0
    %334 = vmatprep.subr.mxu0 0.0
    %335 = vmatpush1.msra.mxu0 0.0
    %336 = vmatprep.subr.mxu0 0.0
    %337 = vmatpush1.msra.mxu0 0.0
    %338 = vmatprep.subr.mxu0 0.0
    %339 = vmatpush1.msra.mxu0 0.0
    %340 = vmatprep.subr.mxu0 0.0
    %341 = vmatpush1.msra.mxu0 0.0
    %342 = vmatprep.subr.mxu0 0.0
    %343 = vmatpush1.msra.mxu0 0.0
    %344 = vmatprep.subr.mxu0 0.0
    %345 = vmatpush1.msra.mxu0 0.0
    %346 = vmatprep.subr.mxu0 0.0
    %347 = vmatpush1.msra.mxu0 0.0
    %348 = vmatprep.subr.mxu0 0.0
    %349 = vmatpush1.msra.mxu0 0.0
    %350 = vmatprep.subr.mxu0 0.0
    %351 = vmatpush1.msra.mxu0 0.0
    %352 = vmatprep.subr.mxu0 0.0
    %353 = vmatpush1.msra.mxu0 0.0
    %354 = vmatprep.subr.mxu0 0.0
    %355 = vmatpush1.msra.mxu0 0.0
    %356 = vmatprep.subr.mxu0 0.0
    %357 = vmatpush1.msra.mxu0 0.0
    %358 = vmatprep.subr.mxu0 0.0
    %359 = vmatpush1.msra.mxu0 0.0
    %360 = vmatprep.subr.mxu0 0.0
    %361 = vmatpush1.msra.mxu0 0.0
    %362 = vmatprep.subr.mxu0 0.0
    %363 = vmatpush1.msra.mxu0 0.0
    %364 = vmatprep.subr.mxu0 0.0
    %365 = vmatpush1.msra.mxu0 0.0
    %366 = vmatprep.subr.mxu0 0.0
    %367 = vmatpush1.msra.mxu0 0.0
    %368 = vmatprep.subr.mxu0 0.0
    %369 = vmatpush1.msra.mxu0 0.0
    %370 = vmatprep.subr.mxu0 0.0
    %371 = vmatpush1.msra.mxu0 0.0
    %372 = vmatprep.subr.mxu0 0.0
    %373 = vmatpush1.msra.mxu0 0.0
    %374 = vmatprep.subr.mxu0 0.0
    %375 = vmatpush1.msra.mxu0 0.0
    %376 = vmatprep.subr.mxu0 0.0
    %377 = vmatpush1.msra.mxu0 0.0
    %378 = vmatprep.subr.mxu0 0.0
    %379 = vmatpush1.msra.mxu0 0.0
    %380 = vmatprep.subr.mxu0 0.0
    %381 = vmatpush1.msra.mxu0 0.0
    %382 = vmatprep.subr.mxu0 0.0
    %383 = vmatpush1.msra.mxu0 0.0
    %384 = vmatprep.subr.mxu0 0.0
    %385 = vmatpush1.msra.mxu0 0.0
    %386 = vmatprep.subr.mxu0 0.0
    %387 = vmatpush1.msra.mxu0 0.0
    %388 = vmatprep.mubr.f32.mxu0 0.0
    %389 = vmatmul.mubr.f32.gmra.mrb[0].mxu0 %v239
    %v390 = vpop.f32.mrb[0].mxu0
    %v391 = vadd.f32 %v233, %v390
    %v392 = vpop.f32.mrb[0].mxu0
    %v393 = vadd.f32 %v235, %v392
    %394 = vdwg.mxu0
    %v395 = vld [vmem:[%s4] sm:$0xf]
    %v397 = vlaneseq
    %v398 = vshrl.u32 %v397, 7
    %v399 = vsub.s32 0, %v398
    %v400 = vrot.slane %v395, %v399
    %v401 = vlaneseq
    %v402 = vshrl.u32 %v401, 7
    %v403 = vsub.s32 1, %v402
    %v404 = vrot.slane %v395, %v403
    %v405 = vlaneseq
    %v406 = vshrl.u32 %v405, 7
    %v407 = vsub.s32 2, %v406
    %v408 = vrot.slane %v395, %v407
    %v409 = vlaneseq
    %v410 = vshrl.u32 %v409, 7
    %v411 = vsub.s32 3, %v410
    %v412 = vrot.slane %v395, %v411
    %v417 = vadd.f32 %v320, %v400
    %v418 = vadd.f32 %v322, %v404
    %v419 = vadd.f32 %v391, %v408
    %v420 = vadd.f32 %v393, %v412
    %v421 = vmax.f32 %v417, 0.0
    %v422 = vmax.f32 %v418, 0.0
    %v423 = vmax.f32 %v419, 0.0
    %v424 = vmax.f32 %v420, 0.0
    %v425 = vld [vmem:[%s5] sm:$0xff]
    %v426 = vld [vmem:[%s5 + $0x8] sm:$0xff]
    %v427 = vld [vmem:[%s5 + $0x10] sm:$0xff]
    %v428 = vld [vmem:[%s5 + $0x18] sm:$0xff]
    %v429 = vld [vmem:[%s5 + $0x20] sm:$0xff]
    %v430 = vld [vmem:[%s5 + $0x28] sm:$0xff]
    %v431 = vld [vmem:[%s5 + $0x30] sm:$0xff]
    %v432 = vld [vmem:[%s5 + $0x38] sm:$0xff]
    %v433 = vld [vmem:[%s5 + $0x40] sm:$0xff]
    %v434 = vld [vmem:[%s5 + $0x48] sm:$0xff]
    %v435 = vld [vmem:[%s5 + $0x50] sm:$0xff]
    %v436 = vld [vmem:[%s5 + $0x58] sm:$0xff]
    %v437 = vld [vmem:[%s5 + $0x60] sm:$0xff]
    %v438 = vld [vmem:[%s5 + $0x68] sm:$0xff]
    %v439 = vld [vmem:[%s5 + $0x70] sm:$0xff]
    %v440 = vld [vmem:[%s5 + $0x78] sm:$0xff]
    %v441 = vld [vmem:[%s5 + $0x80] sm:$0xff]
    %v442 = vld [vmem:[%s5 + $0x88] sm:$0xff]
    %v443 = vld [vmem:[%s5 + $0x90] sm:$0xff]
    %v444 = vld [vmem:[%s5 + $0x98] sm:$0xff]
    %v445 = vld [vmem:[%s5 + $0xa0] sm:$0xff]
    %v446 = vld [vmem:[%s5 + $0xa8] sm:$0xff]
    %v447 = vld [vmem:[%s5 + $0xb0] sm:$0xff]
    %v448 = vld [vmem:[%s5 + $0xb8] sm:$0xff]
    %v449 = vld [vmem:[%s5 + $0xc0] sm:$0xff]
    %v450 = vld [vmem:[%s5 + $0xc8] sm:$0xff]
    %v451 = vld [vmem:[%s5 + $0xd0] sm:$0xff]
    %v452 = vld [vmem:[%s5 + $0xd8] sm:$0xff]
    %v453 = vld [vmem:[%s5 + $0xe0] sm:$0xff]
    %v454 = vld [vmem:[%s5 + $0xe8] sm:$0xff]
    %v455 = vld [vmem:[%s5 + $0xf0] sm:$0xff]
    %v456 = vld [vmem:[%s5 + $0xf8] sm:$0xff]
    %v457 = vld [vmem:[%s5 + $0x100] sm:$0xff]
    %v458 = vld [vmem:[%s5 + $0x108] sm:$0xff]
    %v459 = vld [vmem:[%s5 + $0x110] sm:$0xff]
    %v460 = vld [vmem:[%s5 + $0x118] sm:$0xff]
    %v461 = vld [vmem:[%s5 + $0x120] sm:$0xff]
    %v462 = vld [vmem:[%s5 + $0x128] sm:$0xff]
    %v463 = vld [vmem:[%s5 + $0x130] sm:$0xff]
    %v464 = vld [vmem:[%s5 + $0x138] sm:$0xff]
    %v465 = vld [vmem:[%s5 + $0x140] sm:$0xff]
    %v466 = vld [vmem:[%s5 + $0x148] sm:$0xff]
    %v467 = vld [vmem:[%s5 + $0x150] sm:$0xff]
    %v468 = vld [vmem:[%s5 + $0x158] sm:$0xff]
    %v469 = vld [vmem:[%s5 + $0x160] sm:$0xff]
    %v470 = vld [vmem:[%s5 + $0x168] sm:$0xff]
    %v471 = vld [vmem:[%s5 + $0x170] sm:$0xff]
    %v472 = vld [vmem:[%s5 + $0x178] sm:$0xff]
    %v473 = vld [vmem:[%s5 + $0x180] sm:$0xff]
    %v474 = vld [vmem:[%s5 + $0x188] sm:$0xff]
    %v475 = vld [vmem:[%s5 + $0x190] sm:$0xff]
    %v476 = vld [vmem:[%s5 + $0x198] sm:$0xff]
    %v477 = vld [vmem:[%s5 + $0x1a0] sm:$0xff]
    %v478 = vld [vmem:[%s5 + $0x1a8] sm:$0xff]
    %v479 = vld [vmem:[%s5 + $0x1b0] sm:$0xff]
    %v480 = vld [vmem:[%s5 + $0x1b8] sm:$0xff]
    %v481 = vld [vmem:[%s5 + $0x1c0] sm:$0xff]
    %v482 = vld [vmem:[%s5 + $0x1c8] sm:$0xff]
    %v483 = vld [vmem:[%s5 + $0x1d0] sm:$0xff]
    %v484 = vld [vmem:[%s5 + $0x1d8] sm:$0xff]
    %v485 = vld [vmem:[%s5 + $0x1e0] sm:$0xff]
    %v486 = vld [vmem:[%s5 + $0x1e8] sm:$0xff]
    %v487 = vld [vmem:[%s5 + $0x1f0] sm:$0xff]
    %v488 = vld [vmem:[%s5 + $0x1f8] sm:$0xff]
    %v489 = vld [vmem:[%s6] sm:$0x3]
    %v491 = vlaneseq
    %v492 = vshrl.u32 %v491, 7
    %v493 = vsub.s32 0, %v492
    %v494 = vrot.slane %v489, %v493
    %v495 = vlaneseq
    %v496 = vshrl.u32 %v495, 7
    %v497 = vsub.s32 1, %v496
    %v498 = vrot.slane %v489, %v497
    %501 = vmatprep.subr.mxu0 %v426
    %502 = vmatpush1.msra.mxu0 %v425
    %503 = vmatprep.subr.mxu0 %v428
    %504 = vmatpush1.msra.mxu0 %v427
    %505 = vmatprep.subr.mxu0 %v430
    %506 = vmatpush1.msra.mxu0 %v429
    %507 = vmatprep.subr.mxu0 %v432
    %508 = vmatpush1.msra.mxu0 %v431
    %509 = vmatprep.subr.mxu0 %v434
    %510 = vmatpush1.msra.mxu0 %v433
    %511 = vmatprep.subr.mxu0 %v436
    %512 = vmatpush1.msra.mxu0 %v435
    %513 = vmatprep.subr.mxu0 %v438
    %514 = vmatpush1.msra.mxu0 %v437
    %515 = vmatprep.subr.mxu0 %v440
    %516 = vmatpush1.msra.mxu0 %v439
    %517 = vmatprep.subr.mxu0 %v442
    %518 = vmatpush1.msra.mxu0 %v441
    %519 = vmatprep.subr.mxu0 %v444
    %520 = vmatpush1.msra.mxu0 %v443
    %521 = vmatprep.subr.mxu0 %v446
    %522 = vmatpush1.msra.mxu0 %v445
    %523 = vmatprep.subr.mxu0 %v448
    %524 = vmatpush1.msra.mxu0 %v447
    %525 = vmatprep.subr.mxu0 %v450
    %526 = vmatpush1.msra.mxu0 %v449
    %527 = vmatprep.subr.mxu0 %v452
    %528 = vmatpush1.msra.mxu0 %v451
    %529 = vmatprep.subr.mxu0 %v454
    %530 = vmatpush1.msra.mxu0 %v453
    %531 = vmatprep.subr.mxu0 %v456
    %532 = vmatpush1.msra.mxu0 %v455
    %533 = vmatprep.subr.mxu0 %v458
    %534 = vmatpush1.msra.mxu0 %v457
    %535 = vmatprep.subr.mxu0 %v460
    %536 = vmatpush1.msra.mxu0 %v459
    %537 = vmatprep.subr.mxu0 %v462
    %538 = vmatpush1.msra.mxu0 %v461
    %539 = vmatprep.subr.mxu0 %v464
    %540 = vmatpush1.msra.mxu0 %v463
    %541 = vmatprep.subr.mxu0 %v466
    %542 = vmatpush1.msra.mxu0 %v465
    %543 = vmatprep.subr.mxu0 %v468
    %544 = vmatpush1.msra.mxu0 %v467
    %545 = vmatprep.subr.mxu0 %v470
    %546 = vmatpush1.msra.mxu0 %v469
    %547 = vmatprep.subr.mxu0 %v472
    %548 = vmatpush1.msra.mxu0 %v471
    %549 = vmatprep.subr.mxu0 %v474
    %550 = vmatpush1.msra.mxu0 %v473
    %551 = vmatprep.subr.mxu0 %v476
    %552 = vmatpush1.msra.mxu0 %v475
    %553 = vmatprep.subr.mxu0 %v478
    %554 = vmatpush1.msra.mxu0 %v477
    %555 = vmatprep.subr.mxu0 %v480
    %556 = vmatpush1.msra.mxu0 %v479
    %557 = vmatprep.subr.mxu0 %v482
    %558 = vmatpush1.msra.mxu0 %v481
    %559 = vmatprep.subr.mxu0 %v484
    %560 = vmatpush1.msra.mxu0 %v483
    %561 = vmatprep.subr.mxu0 %v486
    %562 = vmatpush1.msra.mxu0 %v485
    %563 = vmatprep.subr.mxu0 %v488
    %564 = vmatpush1.msra.mxu0 %v487
    %565 = vmatprep.mubr.f32.mxu0 %v422
    %566 = vmatmul.mubr.f32.gmra.mrb[0].mxu0 %v421
    %v567 = vpop.f32.mrb[0].mxu0
    %v568 = vadd.f32 %v494, %v567
    %v569 = vpop.f32.mrb[0].mxu0
    %v570 = vadd.f32 %v498, %v569
    %571 = vdwg.mxu0
    %v572 = vmax.f32 %v568, 0.0
    %v573 = vmax.f32 %v570, 0.0
    %v574 = vld [vmem:[#allocation4] sm:$0xff]
    %v575 = vld [vmem:[#allocation4 + $0x8] sm:$0xff]
    %v576 = vld [vmem:[#allocation4 + $0x10] sm:$0xff]
    %v577 = vld [vmem:[#allocation4 + $0x18] sm:$0xff]
    %v578 = vld [vmem:[#allocation4 + $0x20] sm:$0xff]
    %v579 = vld [vmem:[#allocation4 + $0x28] sm:$0xff]
    %v580 = vld [vmem:[#allocation4 + $0x30] sm:$0xff]
    %v581 = vld [vmem:[#allocation4 + $0x38] sm:$0xff]
    %v582 = vld [vmem:[#allocation4 + $0x40] sm:$0xff]
    %v583 = vld [vmem:[#allocation4 + $0x48] sm:$0xff]
    %v584 = vld [vmem:[#allocation4 + $0x50] sm:$0xff]
    %v585 = vld [vmem:[#allocation4 + $0x58] sm:$0xff]
    %v586 = vld [vmem:[#allocation4 + $0x60] sm:$0xff]
    %v587 = vld [vmem:[#allocation4 + $0x68] sm:$0xff]
    %v588 = vld [vmem:[#allocation4 + $0x70] sm:$0xff]
    %v589 = vld [vmem:[#allocation4 + $0x78] sm:$0xff]
    %v590 = vld [vmem:[#allocation4 + $0x80] sm:$0xff]
    %v591 = vld [vmem:[#allocation4 + $0x88] sm:$0xff]
    %v592 = vld [vmem:[#allocation4 + $0x90] sm:$0xff]
    %v593 = vld [vmem:[#allocation4 + $0x98] sm:$0xff]
    %v594 = vld [vmem:[#allocation4 + $0xa0] sm:$0xff]
    %v595 = vld [vmem:[#allocation4 + $0xa8] sm:$0xff]
    %v596 = vld [vmem:[#allocation4 + $0xb0] sm:$0xff]
    %v597 = vld [vmem:[#allocation4 + $0xb8] sm:$0xff]
    %v598 = vld [vmem:[#allocation4 + $0xc0] sm:$0xff]
    %v599 = vld [vmem:[#allocation4 + $0xc8] sm:$0xff]
    %v600 = vld [vmem:[#allocation4 + $0xd0] sm:$0xff]
    %v601 = vld [vmem:[#allocation4 + $0xd8] sm:$0xff]
    %v602 = vld [vmem:[#allocation4 + $0xe0] sm:$0xff]
    %v603 = vld [vmem:[#allocation4 + $0xe8] sm:$0xff]
    %v604 = vld [vmem:[#allocation4 + $0xf0] sm:$0xff]
    %v605 = vld [vmem:[#allocation4 + $0xf8] sm:$0xff]
    %v606 = vld [vmem:[#allocation4 + $0x100] sm:$0xff]
    %v607 = vld [vmem:[#allocation4 + $0x108] sm:$0xff]
    %v608 = vld [vmem:[#allocation4 + $0x110] sm:$0xff]
    %v609 = vld [vmem:[#allocation4 + $0x118] sm:$0xff]
    %v610 = vld [vmem:[#allocation4 + $0x120] sm:$0xff]
    %v611 = vld [vmem:[#allocation4 + $0x128] sm:$0xff]
    %v612 = vld [vmem:[#allocation4 + $0x130] sm:$0xff]
    %v613 = vld [vmem:[#allocation4 + $0x138] sm:$0xff]
    %v614 = vld [vmem:[#allocation4 + $0x140] sm:$0xff]
    %v615 = vld [vmem:[#allocation4 + $0x148] sm:$0xff]
    %v616 = vld [vmem:[#allocation4 + $0x150] sm:$0xff]
    %v617 = vld [vmem:[#allocation4 + $0x158] sm:$0xff]
    %v618 = vld [vmem:[#allocation4 + $0x160] sm:$0xff]
    %v619 = vld [vmem:[#allocation4 + $0x168] sm:$0xff]
    %v620 = vld [vmem:[#allocation4 + $0x170] sm:$0xff]
    %v621 = vld [vmem:[#allocation4 + $0x178] sm:$0xff]
    %v622 = vld [vmem:[#allocation4 + $0x180] sm:$0xff]
    %v623 = vld [vmem:[#allocation4 + $0x188] sm:$0xff]
    %v624 = vld [vmem:[#allocation4 + $0x190] sm:$0xff]
    %v625 = vld [vmem:[#allocation4 + $0x198] sm:$0xff]
    %v626 = vld [vmem:[#allocation4 + $0x1a0] sm:$0xff]
    %v627 = vld [vmem:[#allocation4 + $0x1a8] sm:$0xff]
    %v628 = vld [vmem:[#allocation4 + $0x1b0] sm:$0xff]
    %v629 = vld [vmem:[#allocation4 + $0x1b8] sm:$0xff]
    %v630 = vld [vmem:[#allocation4 + $0x1c0] sm:$0xff]
    %v631 = vld [vmem:[#allocation4 + $0x1c8] sm:$0xff]
    %v632 = vld [vmem:[#allocation4 + $0x1d0] sm:$0xff]
    %v633 = vld [vmem:[#allocation4 + $0x1d8] sm:$0xff]
    %v634 = vld [vmem:[#allocation4 + $0x1e0] sm:$0xff]
    %v635 = vld [vmem:[#allocation4 + $0x1e8] sm:$0xff]
    %v636 = vld [vmem:[#allocation4 + $0x1f0] sm:$0xff]
    %v637 = vld [vmem:[#allocation4 + $0x1f8] sm:$0xff]
    %v638 = vld [vmem:[%s8] sm:$0x3]
    %v640 = vlaneseq
    %v641 = vshrl.u32 %v640, 7
    %v642 = vsub.s32 0, %v641
    %v643 = vrot.slane %v638, %v642
    %v644 = vlaneseq
    %v645 = vshrl.u32 %v644, 7
    %v646 = vsub.s32 1, %v645
    %v647 = vrot.slane %v638, %v646
    %650 = vmatprep.subr.mxu0 %v575
    %651 = vmatpush1.msra.mxu0 %v574
    %652 = vmatprep.subr.mxu0 %v577
    %653 = vmatpush1.msra.mxu0 %v576
    %654 = vmatprep.subr.mxu0 %v579
    %655 = vmatpush1.msra.mxu0 %v578
    %656 = vmatprep.subr.mxu0 %v581
    %657 = vmatpush1.msra.mxu0 %v580
    %658 = vmatprep.subr.mxu0 %v583
    %659 = vmatpush1.msra.mxu0 %v582
    %660 = vmatprep.subr.mxu0 %v585
    %661 = vmatpush1.msra.mxu0 %v584
    %662 = vmatprep.subr.mxu0 %v587
    %663 = vmatpush1.msra.mxu0 %v586
    %664 = vmatprep.subr.mxu0 %v589
    %665 = vmatpush1.msra.mxu0 %v588
    %666 = vmatprep.subr.mxu0 %v591
    %667 = vmatpush1.msra.mxu0 %v590
    %668 = vmatprep.subr.mxu0 %v593
    %669 = vmatpush1.msra.mxu0 %v592
    %670 = vmatprep.subr.mxu0 %v595
    %671 = vmatpush1.msra.mxu0 %v594
    %672 = vmatprep.subr.mxu0 %v597
    %673 = vmatpush1.msra.mxu0 %v596
    %674 = vmatprep.subr.mxu0 %v599
    %675 = vmatpush1.msra.mxu0 %v598
    %676 = vmatprep.subr.mxu0 %v601
    %677 = vmatpush1.msra.mxu0 %v600
    %678 = vmatprep.subr.mxu0 %v603
    %679 = vmatpush1.msra.mxu0 %v602
    %680 = vmatprep.subr.mxu0 %v605
    %681 = vmatpush1.msra.mxu0 %v604
    %682 = vmatprep.subr.mxu0 %v607
    %683 = vmatpush1.msra.mxu0 %v606
    %684 = vmatprep.subr.mxu0 %v609
    %685 = vmatpush1.msra.mxu0 %v608
    %686 = vmatprep.subr.mxu0 %v611
    %687 = vmatpush1.msra.mxu0 %v610
    %688 = vmatprep.subr.mxu0 %v613
    %689 = vmatpush1.msra.mxu0 %v612
    %690 = vmatprep.subr.mxu0 %v615
    %691 = vmatpush1.msra.mxu0 %v614
    %692 = vmatprep.subr.mxu0 %v617
    %693 = vmatpush1.msra.mxu0 %v616
    %694 = vmatprep.subr.mxu0 %v619
    %695 = vmatpush1.msra.mxu0 %v618
    %696 = vmatprep.subr.mxu0 %v621
    %697 = vmatpush1.msra.mxu0 %v620
    %698 = vmatprep.subr.mxu0 %v623
    %699 = vmatpush1.msra.mxu0 %v622
    %700 = vmatprep.subr.mxu0 %v625
    %701 = vmatpush1.msra.mxu0 %v624
    %702 = vmatprep.subr.mxu0 %v627
    %703 = vmatpush1.msra.mxu0 %v626
    %704 = vmatprep.subr.mxu0 %v629
    %705 = vmatpush1.msra.mxu0 %v628
    %706 = vmatprep.subr.mxu0 %v631
    %707 = vmatpush1.msra.mxu0 %v630
    %708 = vmatprep.subr.mxu0 %v633
    %709 = vmatpush1.msra.mxu0 %v632
    %710 = vmatprep.subr.mxu0 %v635
    %711 = vmatpush1.msra.mxu0 %v634
    %712 = vmatprep.subr.mxu0 %v637
    %713 = vmatpush1.msra.mxu0 %v636
    %714 = vmatprep.mubr.f32.mxu0 %v424
    %715 = vmatmul.mubr.f32.gmra.mrb[0].mxu0 %v423
    %v716 = vpop.f32.mrb[0].mxu0
    %v717 = vadd.f32 %v643, %v716
    %v718 = vpop.f32.mrb[0].mxu0
    %v719 = vadd.f32 %v647, %v718
    %720 = vdwg.mxu0
    %v721 = vmax.f32 %v717, 0.0
    %v722 = vmax.f32 %v719, 0.0
    %v723 = vld [vmem:[%s9] sm:$0xff]
    %v724 = vld [vmem:[%s9 + $0x8] sm:$0xff]
    %v725 = vld [vmem:[%s9 + $0x10] sm:$0xff]
    %v726 = vld [vmem:[%s9 + $0x18] sm:$0xff]
    %v727 = vld [vmem:[%s9 + $0x20] sm:$0xff]
    %v728 = vld [vmem:[%s9 + $0x28] sm:$0xff]
    %v729 = vld [vmem:[%s9 + $0x30] sm:$0xff]
    %v730 = vld [vmem:[%s9 + $0x38] sm:$0xff]
    %v731 = vld [vmem:[%s9 + $0x40] sm:$0xff]
    %v732 = vld [vmem:[%s9 + $0x48] sm:$0xff]
    %v733 = vld [vmem:[%s9 + $0x50] sm:$0xff]
    %v734 = vld [vmem:[%s9 + $0x58] sm:$0xff]
    %v735 = vld [vmem:[%s9 + $0x60] sm:$0xff]
    %v736 = vld [vmem:[%s9 + $0x68] sm:$0xff]
    %v737 = vld [vmem:[%s9 + $0x70] sm:$0xff]
    %v738 = vld [vmem:[%s9 + $0x78] sm:$0xff]
    %v739 = vld [vmem:[%s9 + $0x80] sm:$0xff]
    %v740 = vld [vmem:[%s9 + $0x88] sm:$0xff]
    %v741 = vld [vmem:[%s9 + $0x90] sm:$0xff]
    %v742 = vld [vmem:[%s9 + $0x98] sm:$0xff]
    %v743 = vld [vmem:[%s9 + $0xa0] sm:$0xff]
    %v744 = vld [vmem:[%s9 + $0xa8] sm:$0xff]
    %v745 = vld [vmem:[%s9 + $0xb0] sm:$0xff]
    %v746 = vld [vmem:[%s9 + $0xb8] sm:$0xff]
    %v747 = vld [vmem:[%s9 + $0xc0] sm:$0xff]
    %v748 = vld [vmem:[%s9 + $0xc8] sm:$0xff]
    %v749 = vld [vmem:[%s9 + $0xd0] sm:$0xff]
    %v750 = vld [vmem:[%s9 + $0xd8] sm:$0xff]
    %v751 = vld [vmem:[%s9 + $0xe0] sm:$0xff]
    %v752 = vld [vmem:[%s9 + $0xe8] sm:$0xff]
    %v753 = vld [vmem:[%s9 + $0xf0] sm:$0xff]
    %v754 = vld [vmem:[%s9 + $0xf8] sm:$0xff]
    %v755 = vld [vmem:[%s9 + $0x100] sm:$0xff]
    %v756 = vld [vmem:[%s9 + $0x108] sm:$0xff]
    %v757 = vld [vmem:[%s9 + $0x110] sm:$0xff]
    %v758 = vld [vmem:[%s9 + $0x118] sm:$0xff]
    %v759 = vld [vmem:[%s9 + $0x120] sm:$0xff]
    %v760 = vld [vmem:[%s9 + $0x128] sm:$0xff]
    %v761 = vld [vmem:[%s9 + $0x130] sm:$0xff]
    %v762 = vld [vmem:[%s9 + $0x138] sm:$0xff]
    %v763 = vld [vmem:[%s9 + $0x140] sm:$0xff]
    %v764 = vld [vmem:[%s9 + $0x148] sm:$0xff]
    %v765 = vld [vmem:[%s9 + $0x150] sm:$0xff]
    %v766 = vld [vmem:[%s9 + $0x158] sm:$0xff]
    %v767 = vld [vmem:[%s9 + $0x160] sm:$0xff]
    %v768 = vld [vmem:[%s9 + $0x168] sm:$0xff]
    %v769 = vld [vmem:[%s9 + $0x170] sm:$0xff]
    %v770 = vld [vmem:[%s9 + $0x178] sm:$0xff]
    %v771 = vld [vmem:[%s9 + $0x180] sm:$0xff]
    %v772 = vld [vmem:[%s9 + $0x188] sm:$0xff]
    %v773 = vld [vmem:[%s9 + $0x190] sm:$0xff]
    %v774 = vld [vmem:[%s9 + $0x198] sm:$0xff]
    %v775 = vld [vmem:[%s9 + $0x1a0] sm:$0xff]
    %v776 = vld [vmem:[%s9 + $0x1a8] sm:$0xff]
    %v777 = vld [vmem:[%s9 + $0x1b0] sm:$0xff]
    %v778 = vld [vmem:[%s9 + $0x1b8] sm:$0xff]
    %v779 = vld [vmem:[%s9 + $0x1c0] sm:$0xff]
    %v780 = vld [vmem:[%s9 + $0x1c8] sm:$0xff]
    %v781 = vld [vmem:[%s9 + $0x1d0] sm:$0xff]
    %v782 = vld [vmem:[%s9 + $0x1d8] sm:$0xff]
    %v783 = vld [vmem:[%s9 + $0x1e0] sm:$0xff]
    %v784 = vld [vmem:[%s9 + $0x1e8] sm:$0xff]
    %v785 = vld [vmem:[%s9 + $0x1f0] sm:$0xff]
    %v786 = vld [vmem:[%s9 + $0x1f8] sm:$0xff]
    %v787 = vld [vmem:[%s10] sm:$0x1]
    %v789 = vlaneseq
    %v790 = vshrl.u32 %v789, 7
    %v791 = vsub.s32 0, %v790
    %v792 = vrot.slane %v787, %v791
    %794 = vmatprep.subr.mxu0 0.0
    %795 = vmatpush1.msra.mxu0 %v723
    %796 = vmatprep.subr.mxu0 0.0
    %797 = vmatpush1.msra.mxu0 %v724
    %798 = vmatprep.subr.mxu0 0.0
    %799 = vmatpush1.msra.mxu0 %v725
    %800 = vmatprep.subr.mxu0 0.0
    %801 = vmatpush1.msra.mxu0 %v726
    %802 = vmatprep.subr.mxu0 0.0
    %803 = vmatpush1.msra.mxu0 %v727
    %804 = vmatprep.subr.mxu0 0.0
    %805 = vmatpush1.msra.mxu0 %v728
    %806 = vmatprep.subr.mxu0 0.0
    %807 = vmatpush1.msra.mxu0 %v729
    %808 = vmatprep.subr.mxu0 0.0
    %809 = vmatpush1.msra.mxu0 %v730
    %810 = vmatprep.subr.mxu0 0.0
    %811 = vmatpush1.msra.mxu0 %v731
    %812 = vmatprep.subr.mxu0 0.0
    %813 = vmatpush1.msra.mxu0 %v732
    %814 = vmatprep.subr.mxu0 0.0
    %815 = vmatpush1.msra.mxu0 %v733
    %816 = vmatprep.subr.mxu0 0.0
    %817 = vmatpush1.msra.mxu0 %v734
    %818 = vmatprep.subr.mxu0 0.0
    %819 = vmatpush1.msra.mxu0 %v735
    %820 = vmatprep.subr.mxu0 0.0
    %821 = vmatpush1.msra.mxu0 %v736
    %822 = vmatprep.subr.mxu0 0.0
    %823 = vmatpush1.msra.mxu0 %v737
    %824 = vmatprep.subr.mxu0 0.0
    %825 = vmatpush1.msra.mxu0 %v738
    %826 = vmatprep.subr.mxu0 0.0
    %827 = vmatpush1.msra.mxu0 %v739
    %828 = vmatprep.subr.mxu0 0.0
    %829 = vmatpush1.msra.mxu0 %v740
    %830 = vmatprep.subr.mxu0 0.0
    %831 = vmatpush1.msra.mxu0 %v741
    %832 = vmatprep.subr.mxu0 0.0
    %833 = vmatpush1.msra.mxu0 %v742
    %834 = vmatprep.subr.mxu0 0.0
    %835 = vmatpush1.msra.mxu0 %v743
    %836 = vmatprep.subr.mxu0 0.0
    %837 = vmatpush1.msra.mxu0 %v744
    %838 = vmatprep.subr.mxu0 0.0
    %839 = vmatpush1.msra.mxu0 %v745
    %840 = vmatprep.subr.mxu0 0.0
    %841 = vmatpush1.msra.mxu0 %v746
    %842 = vmatprep.subr.mxu0 0.0
    %843 = vmatpush1.msra.mxu0 %v747
    %844 = vmatprep.subr.mxu0 0.0
    %845 = vmatpush1.msra.mxu0 %v748
    %846 = vmatprep.subr.mxu0 0.0
    %847 = vmatpush1.msra.mxu0 %v749
    %848 = vmatprep.subr.mxu0 0.0
    %849 = vmatpush1.msra.mxu0 %v750
    %850 = vmatprep.subr.mxu0 0.0
    %851 = vmatpush1.msra.mxu0 %v751
    %852 = vmatprep.subr.mxu0 0.0
    %853 = vmatpush1.msra.mxu0 %v752
    %854 = vmatprep.subr.mxu0 0.0
    %855 = vmatpush1.msra.mxu0 %v753
    %856 = vmatprep.subr.mxu0 0.0
    %857 = vmatpush1.msra.mxu0 %v754
    %858 = vmatprep.mubr.f32.mxu0 %v573
    %859 = vmatmul.mubr.f32.gmra.mrb[0].mxu0 %v572
    %v860 = vpop.f32.mrb[0].mxu0
    %v861 = vadd.f32 %v792, %v860
    %v862 = vpop.f32.mrb[0].mxu0
    %863 = vdwg.mxu0
    %864 = vmatprep.subr.mxu0 0.0
    %865 = vmatpush1.msra.mxu0 %v755
    %866 = vmatprep.subr.mxu0 0.0
    %867 = vmatpush1.msra.mxu0 %v756
    %868 = vmatprep.subr.mxu0 0.0
    %869 = vmatpush1.msra.mxu0 %v757
    %870 = vmatprep.subr.mxu0 0.0
    %871 = vmatpush1.msra.mxu0 %v758
    %872 = vmatprep.subr.mxu0 0.0
    %873 = vmatpush1.msra.mxu0 %v759
    %874 = vmatprep.subr.mxu0 0.0
    %875 = vmatpush1.msra.mxu0 %v760
    %876 = vmatprep.subr.mxu0 0.0
    %877 = vmatpush1.msra.mxu0 %v761
    %878 = vmatprep.subr.mxu0 0.0
    %879 = vmatpush1.msra.mxu0 %v762
    %880 = vmatprep.subr.mxu0 0.0
    %881 = vmatpush1.msra.mxu0 %v763
    %882 = vmatprep.subr.mxu0 0.0
    %883 = vmatpush1.msra.mxu0 %v764
    %884 = vmatprep.subr.mxu0 0.0
    %885 = vmatpush1.msra.mxu0 %v765
    %886 = vmatprep.subr.mxu0 0.0
    %887 = vmatpush1.msra.mxu0 %v766
    %888 = vmatprep.subr.mxu0 0.0
    %889 = vmatpush1.msra.mxu0 %v767
    %890 = vmatprep.subr.mxu0 0.0
    %891 = vmatpush1.msra.mxu0 %v768
    %892 = vmatprep.subr.mxu0 0.0
    %893 = vmatpush1.msra.mxu0 %v769
    %894 = vmatprep.subr.mxu0 0.0
    %895 = vmatpush1.msra.mxu0 %v770
    %896 = vmatprep.subr.mxu0 0.0
    %897 = vmatpush1.msra.mxu0 %v771
    %898 = vmatprep.subr.mxu0 0.0
    %899 = vmatpush1.msra.mxu0 %v772
    %900 = vmatprep.subr.mxu0 0.0
    %901 = vmatpush1.msra.mxu0 %v773
    %902 = vmatprep.subr.mxu0 0.0
    %903 = vmatpush1.msra.mxu0 %v774
    %904 = vmatprep.subr.mxu0 0.0
    %905 = vmatpush1.msra.mxu0 %v775
    %906 = vmatprep.subr.mxu0 0.0
    %907 = vmatpush1.msra.mxu0 %v776
    %908 = vmatprep.subr.mxu0 0.0
    %909 = vmatpush1.msra.mxu0 %v777
    %910 = vmatprep.subr.mxu0 0.0
    %911 = vmatpush1.msra.mxu0 %v778
    %912 = vmatprep.subr.mxu0 0.0
    %913 = vmatpush1.msra.mxu0 %v779
    %914 = vmatprep.subr.mxu0 0.0
    %915 = vmatpush1.msra.mxu0 %v780
    %916 = vmatprep.subr.mxu0 0.0
    %917 = vmatpush1.msra.mxu0 %v781
    %918 = vmatprep.subr.mxu0 0.0
    %919 = vmatpush1.msra.mxu0 %v782
    %920 = vmatprep.subr.mxu0 0.0
    %921 = vmatpush1.msra.mxu0 %v783
    %922 = vmatprep.subr.mxu0 0.0
    %923 = vmatpush1.msra.mxu0 %v784
    %924 = vmatprep.subr.mxu0 0.0
    %925 = vmatpush1.msra.mxu0 %v785
    %926 = vmatprep.subr.mxu0 0.0
    %927 = vmatpush1.msra.mxu0 %v786
    %928 = vmatprep.mubr.f32.mxu0 %v722
    %929 = vmatmul.mubr.f32.gmra.mrb[0].mxu0 %v721
    %v930 = vpop.f32.mrb[0].mxu0
    %v931 = vadd.f32 %v861, %v930
    %v932 = vpop.f32.mrb[0].mxu0
    %933 = vdwg.mxu0
    %vm934 = vcmask 15360
    %935 = vst.msk [vmem:[%s11] sm:$0xff] %vm934, %v931
    // Predicated region
    $region54: #{critic_forward.1} parent=1 // pred_check
      _
    $region55: #{critic_forward.1} parent=1 // pred_check_branch
      %937 = sbr.rel (0) target = $region57
    $region56: #{critic_forward.1} parent=1 // pred_region
      _
    $region57: #{critic_forward.1} parent=1 // pred_fallthru
      _
    // Predicated region
    $region58: #{critic_forward.1} parent=1 // pred_check
      _
    $region59: #{critic_forward.1} parent=1 // pred_check_branch
      %939 = sbr.rel (0) target = $region61
    $region60: #{critic_forward.1} parent=1 // pred_region
      _
    $region61: #{critic_forward.1} parent=1 // pred_fallthru
      _
    %940 = vsyncpa [#allocation3], 1
    %941 = vsyncpa [#allocation5], 1

</llo_original>
